<compile_context>
chip_gen: v7x
topology: tpu7x:2x2x1
jax: 0.10.0
libtpu: 0.0.40
codegen_flags: <defaults>
</compile_context>

<pallas_src>
import jax
import jax.numpy as jnp
from jax.experimental import pallas as pl
from jax.experimental.pallas import tpu as pltpu


def _normalize_kernel(x_ref, mean_ref, var_ref, o_ref):
    # Hoist the reciprocal: n_state reciprocals per tile instead of a
    # rows*n_state broadcast divide; exact (approx=False) to hold 1e-6 tol.
    inv_var = pl.reciprocal(var_ref[...], approx=False)      # (1, lane)
    o_ref[...] = ((x_ref[...] - mean_ref[...]) * inv_var).astype(o_ref.dtype)


def normalize(x, mean, var):
    """q = (x - mean) / var ; mean/var shape (n_state,), x shape (..., n_state)."""
    orig_shape = x.shape
    n_state = orig_shape[-1]
    rows = 1
    for d in orig_shape[:-1]:
        rows *= d

    # --- lane folding: make the last (lane) dim a dense multiple of 128 ------
    fold = 1
    if n_state < 128 and 128 % n_state == 0:
        f = 128 // n_state
        if rows % f == 0:
            fold = f
    lane = n_state * fold
    rows_f = rows // fold

    x2d = x.reshape(rows_f, lane)
    mean2d = jnp.tile(mean, fold).reshape(1, lane)
    var2d = jnp.tile(var, fold).reshape(1, lane)

    # --- row tiling: ~2 MiB per x tile, multiple of 8 sublanes ---------------
    itemsize = jnp.dtype(x.dtype).itemsize
    target_tile_bytes = 2 * 1024 * 1024
    tile_rows = target_tile_bytes // (lane * itemsize)
    tile_rows = max(8, (tile_rows // 8) * 8)
    if tile_rows >= rows_f:
        # full-extent block (allowed even when rows_f is not a multiple of 8)
        tile_rows = rows_f
        padded_rows = rows_f
    else:
        padded_rows = pl.cdiv(rows_f, tile_rows) * tile_rows

    if padded_rows != rows_f:
        x2d = jnp.pad(x2d, ((0, padded_rows - rows_f), (0, 0)))

    grid = (padded_rows // tile_rows,)

    out = pl.pallas_call(
        _normalize_kernel,
        out_shape=jax.ShapeDtypeStruct((padded_rows, lane), x.dtype),
        grid_spec=pltpu.PrefetchScalarGridSpec(
            num_scalar_prefetch=0,
            grid=grid,
            in_specs=[
                pl.BlockSpec((tile_rows, lane), lambda i: (i, 0)),
                pl.BlockSpec((1, lane), lambda i: (0, 0)),  # grid-invariant
                pl.BlockSpec((1, lane), lambda i: (0, 0)),  # grid-invariant
            ],
            out_specs=pl.BlockSpec((tile_rows, lane), lambda i: (i, 0)),
        ),
        compiler_params=pltpu.CompilerParams(
            dimension_semantics=("parallel",),          # independent row tiles
            vmem_limit_bytes=32 * 1024 * 1024,          # safe on v5e/v6e/v7x
        ),
    )(x2d, mean2d, var2d)

    if padded_rows != rows_f:
        out = out[:rows_f]
    return out.reshape(orig_shape)


if __name__ == "__main__":
    # Small shapes consistent with the module: x of shape (batch, seq, n_state)
    batch, seq, n_state = 2, 8, 32

    key = jax.random.PRNGKey(0)
    kx, km, kv = jax.random.split(key, 3)

    x = jax.random.normal(kx, (batch, seq, n_state), dtype=jnp.float32)
    # torch.rand -> uniform [0, 1); deterministic init via jax.random
    mean = jax.random.uniform(km, (n_state,), dtype=jnp.float32)
    var = jax.random.uniform(kv, (n_state,), dtype=jnp.float32)

    q = normalize(x, mean, var)
    q = jax.block_until_ready(q)

    # Correctness check against the pure-JAX reference
    ref = (x - mean) / var
    assert q.shape == x.shape
    assert jnp.allclose(q, ref, atol=1e-5, rtol=1e-5)

    print("KERNEL_OK")
</pallas_src>

<mosaic_0001>
module attributes {stable_mosaic.version = 11 : i64} {
  func.func @_normalize_kernel(%arg0: i32, %arg1: memref<4x128xf32, #tpu.memory_space<vmem>>, %arg2: memref<1x128xf32, #tpu.memory_space<vmem>>, %arg3: memref<1x128xf32, #tpu.memory_space<vmem>>, %arg4: memref<4x128xf32, #tpu.memory_space<vmem>>) attributes {dimension_semantics = [#tpu.dimension_semantics<parallel>], iteration_bounds = array<i64: 1>, scalar_prefetch = 0 : i64, scratch_operands = 0 : i64, tpu.core_type = #tpu.core_type<tc>, window_params = [{transform_indices = @transform_0, window_bounds = array<i64: 4, 128>}, {pipeline_mode = #tpu.pipeline_mode<synchronous>, transform_indices = @transform_1, window_bounds = array<i64: 1, 128>}, {pipeline_mode = #tpu.pipeline_mode<synchronous>, transform_indices = @transform_2, window_bounds = array<i64: 1, 128>}, {transform_indices = @transform_3, window_bounds = array<i64: 4, 128>}]} {
    %c0 = arith.constant 0 : index
    %c0_0 = arith.constant 0 : index
    %0 = vector.load %arg3[%c0, %c0_0] : memref<1x128xf32, #tpu.memory_space<vmem>>, vector<1x128xf32>
    %1 = tpu.reciprocal %0 : vector<1x128xf32> -> vector<1x128xf32>
    %c0_1 = arith.constant 0 : index
    %c0_2 = arith.constant 0 : index
    %2 = vector.load %arg1[%c0_1, %c0_2] : memref<4x128xf32, #tpu.memory_space<vmem>>, vector<4x128xf32>
    %c0_3 = arith.constant 0 : index
    %c0_4 = arith.constant 0 : index
    %3 = vector.load %arg2[%c0_3, %c0_4] : memref<1x128xf32, #tpu.memory_space<vmem>>, vector<1x128xf32>
    %4 = vector.broadcast %3 : vector<1x128xf32> to vector<4x128xf32>
    %5 = arith.subf %2, %4 : vector<4x128xf32>
    %6 = vector.broadcast %1 : vector<1x128xf32> to vector<4x128xf32>
    %7 = arith.mulf %5, %6 : vector<4x128xf32>
    %c0_5 = arith.constant 0 : index
    %c0_6 = arith.constant 0 : index
    %8 = vector.load %arg4[%c0_5, %c0_6] : memref<4x128xf32, #tpu.memory_space<vmem>>, vector<4x128xf32>
    tpu.vector_store %arg4[%c0_5, %c0_6], %7 {strides = array<i32>} : memref<4x128xf32, #tpu.memory_space<vmem>>, vector<4x128xf32>,
    return
  }
  func.func @transform_0(%arg0: i32) -> (i32, i32) {
    %c0_i32 = arith.constant 0 : i32
    %c0_i32_0 = arith.constant 0 : i32
    return %arg0, %c0_i32 : i32, i32
  }
  func.func @transform_1(%arg0: i32) -> (i32, i32) {
    %c0_i32 = arith.constant 0 : i32
    %c0_i32_0 = arith.constant 0 : i32
    %c0_i32_1 = arith.constant 0 : i32
    return %c0_i32, %c0_i32_0 : i32, i32
  }
  func.func @transform_2(%arg0: i32) -> (i32, i32) {
    %c0_i32 = arith.constant 0 : i32
    %c0_i32_0 = arith.constant 0 : i32
    %c0_i32_1 = arith.constant 0 : i32
    return %c0_i32, %c0_i32_0 : i32, i32
  }
  func.func @transform_3(%arg0: i32) -> (i32, i32) {
    %c0_i32 = arith.constant 0 : i32
    %c0_i32_0 = arith.constant 0 : i32
    return %arg0, %c0_i32 : i32, i32
  }
}

</mosaic_0001>

<llo_original>
// kernel: tpu_custom_call.1
$region0: #{tpu_custom_call.1}
  #allocation0 [shape = 'u32[]', space=smem, size = 0x4, offset = 0x4, fixed_abs, tag = 'smem constant byte address 0x4 - core index']
  #allocation1 [shape = 'u32[144,128]{1,0:T(1,128)}', space=vmem, size = 0x12000, scoped, tag = 'internal scratch']
  %s0 = inlined_call_operand.hbm [shape: f32[4,128], index: 0, kind: input, shape index: {}]
  %s1 = inlined_call_operand.vmem [shape: f32[1,128], index: 1, kind: input, shape index: {}]
  %s2 = inlined_call_operand.vmem [shape: f32[1,128], index: 2, kind: input, shape index: {}]
  %s3 = inlined_call_operand.hbm [shape: f32[4,128], index: 3, kind: output, shape index: {}]
  %s4 = sld [smem:[#allocation0]]
  $region26: #{tpu_custom_call.1} parent=0
    _
  %s6 = ssub.s32 1, %s4
  %s7 = scalar_select 0, %s6, %s4
  $region1: #{tpu_custom_call.1} parent=0
    #allocation2 [shape = 'u8[2048]{0}', space=vmem, size = 0x800, scoped, tag = 'input window, operand 0, single buffered']
    #allocation3 [shape = 's32[1]{0}', space=sflag, size = 0x4, scoped, tag = 'scoped memory for tpu_custom_call.1']
    #allocation4 [shape = 's32[1]{0}', space=sflag, size = 0x4, scoped, tag = 'scoped memory for tpu_custom_call.1']
    #allocation5 [shape = 'u8[2048]{0}', space=vmem, size = 0x800, scoped, tag = 'output window, operand 0, single buffered']
    %8 = vsyncpa [#allocation3], 0
    %9 = vsyncpa [#allocation4], 0
    // Predicated region
    $region2: #{tpu_custom_call.1} parent=1 // pred_check
      _
    $region3: #{tpu_custom_call.1} parent=1 // pred_check_branch
      %11 = sbr.rel (0) target = $region5
    $region4: #{tpu_custom_call.1} parent=1 // pred_region
      %s13 = ssub.s32 64, 64
      %14 = vsyncadd [#allocation3], %s13
      %s16 = sshll.u32 [#allocation2], 4
      %s17 = int_to_ptr.vmem [resolvable:$true] %s16
      %19 = dma.hbm_to_vmem [thread:$0]  %s0, 64, %s17, [#allocation3]
    $region5: #{tpu_custom_call.1} parent=1 // pred_fallthru
      _
    // Predicated region
    $region6: #{tpu_custom_call.1} parent=1 // pred_check
      _
    $region7: #{tpu_custom_call.1} parent=1 // pred_check_branch
      %21 = sbr.rel (0) target = $region9
    $region8: #{tpu_custom_call.1} parent=1 // pred_region
      _
    $region9: #{tpu_custom_call.1} parent=1 // pred_fallthru
      _
    // Predicated region
    $region10: #{tpu_custom_call.1} parent=1 // pred_check
      _
    $region11: #{tpu_custom_call.1} parent=1 // pred_check_branch
      %23 = sbr.rel (0) target = $region13
    $region12: #{tpu_custom_call.1} parent=1 // pred_region
      _
    $region13: #{tpu_custom_call.1} parent=1 // pred_fallthru
      _
    // Predicated region
    $region14: #{tpu_custom_call.1} parent=1 // pred_check
      _
    $region15: #{tpu_custom_call.1} parent=1 // pred_check_branch
      %25 = sbr.rel (0) target = $region17
    $region16: #{tpu_custom_call.1} parent=1 // pred_region
      %26 = dma.done [#allocation3], 64
    $region17: #{tpu_custom_call.1} parent=1 // pred_fallthru
      _
    %v27 = vld [vmem:[%s2] sm:$0x1]
    %v28 = vrcp.pop %v27
    %v29 = vld [vmem:[#allocation2] sm:$0xf]
    %v30 = vld [vmem:[%s1] sm:$0x1]
    %v32 = vlaneseq
    %v33 = vshrl.u32 %v32, 7
    %v34 = vsub.s32 0, %v33
    %v35 = vrot.slane %v30, %v34
    %v37 = vsub.f32 %v29, %v35
    %v39 = vlaneseq
    %v40 = vshrl.u32 %v39, 7
    %v41 = vsub.s32 0, %v40
    %v42 = vrot.slane %v28, %v41
    %v44 = vmul.f32 %v37, %v42
    %45 = vst [vmem:[#allocation5] sm:$0xf] %v44
    // Predicated region
    $region18: #{tpu_custom_call.1} parent=1 // pred_check
      _
    $region19: #{tpu_custom_call.1} parent=1 // pred_check_branch
      %47 = sbr.rel (0) target = $region21
    $region20: #{tpu_custom_call.1} parent=1 // pred_region
      %s49 = ssub.s32 64, 64
      %50 = vsyncadd [#allocation4], %s49
      %s52 = sshll.u32 [#allocation5], 4
      %s53 = int_to_ptr.vmem [resolvable:$true] %s52
      %55 = dma.vmem_to_hbm [thread:$0]  %s53, 64, %s3, [#allocation4]
    $region21: #{tpu_custom_call.1} parent=1 // pred_fallthru
      _
    // Predicated region
    $region22: #{tpu_custom_call.1} parent=1 // pred_check
      _
    $region23: #{tpu_custom_call.1} parent=1 // pred_check_branch
      %57 = sbr.rel (0) target = $region25
    $region24: #{tpu_custom_call.1} parent=1 // pred_region
      %58 = dma.done [#allocation4], 64
    $region25: #{tpu_custom_call.1} parent=1 // pred_fallthru
      _
    %59 = vsyncpa [#allocation3], 1
    %60 = vsyncpa [#allocation4], 1

</llo_original>
